<compile_context>
chip_gen: v7x
topology: tpu7x:2x2x1
jax: 0.10.0
libtpu: 0.0.40
codegen_flags: <defaults>
</compile_context>

<pallas_src>
import functools

import jax
import jax.numpy as jnp
from jax.experimental import pallas as pl
from jax.experimental.pallas import tpu as pltpu

DATA_DIM = 2
HIDDEN_DIM = 32
NUM_HIDDEN_LAYER = 3
HALF_DIM = HIDDEN_DIM // 2
NUM_CLASSES = 2


def _round_up(n, m):
    return (n + m - 1) // m * m


def classifier_kernel(x_ref, w1_ref, b1_ref, wh_ref, bh_ref,
                      w2_ref, b2_ref, wo_ref, bo_ref, out_ref):
    x = x_ref[...]                                   # (DATA_DIM, TILE_B)

    # layer1: Linear(2 -> 32) + ReLU.  K=2 is far too thin for the MXU, so do
    # it as DATA_DIM broadcast multiply-adds on the VPU (outer-product style).
    h = w1_ref[:, 0:1] * x[0:1, :]                   # (HIDDEN, 1)*(1, TILE_B)
    for d in range(1, DATA_DIM):
        h = h + w1_ref[:, d:d + 1] * x[d:d + 1, :]
    h = jnp.maximum(h + b1_ref[...], 0.0)            # (HIDDEN, TILE_B)

    # hid_layers: 3 x (Linear(32 -> 32) + ReLU) -- 32x32 matmuls on the MXU,
    # f32 accumulation.  Static unroll (only 3 layers).
    for i in range(NUM_HIDDEN_LAYER):
        h = jnp.dot(wh_ref[i], h, preferred_element_type=jnp.float32)
        h = jnp.maximum(h + bh_ref[i], 0.0)

    # h_layer: Linear(32 -> 16) + ReLU on the MXU.
    h = jnp.dot(w2_ref[...], h, preferred_element_type=jnp.float32)
    h = jnp.maximum(h + b2_ref[...], 0.0)            # (HALF, TILE_B)

    # out_layer: Linear(16 -> 2), no activation.  Only 2 output rows -> do it
    # on the VPU/XLU: broadcast multiply + sublane reduce per class, then one
    # lane-dense (NUM_CLASSES, TILE_B) store.
    rows = []
    for c in range(NUM_CLASSES):
        rows.append(jnp.sum(wo_ref[:, c:c + 1] * h, axis=0, keepdims=True))
    out_ref[...] = jnp.concatenate(rows, axis=0) + bo_ref[...]


@functools.partial(jax.jit, static_argnames=("tile_b",))
def classifier_forward(x, params, *, tile_b=512):
    """x: (batch, DATA_DIM) f32 -> logits (batch, NUM_CLASSES) f32."""
    (w1, b1, wh, bh, w2, b2, wo, bo) = params
    batch = x.shape[0]

    # Feature-major layout: batch on the lane axis.  Pad batch to a multiple
    # of the tile so every grid step is a full lane-dense tile.
    tb = min(tile_b, _round_up(batch, 128))
    padded = _round_up(batch, tb)
    x_t = jnp.pad(x.astype(jnp.float32).T, ((0, 0), (0, padded - batch)))

    grid = (padded // tb,)
    full = lambda i: (0, 0)

    out_t = pl.pallas_call(
        classifier_kernel,
        out_shape=jax.ShapeDtypeStruct((NUM_CLASSES, padded), jnp.float32),
        grid=grid,
        in_specs=[
            pl.BlockSpec((DATA_DIM, tb), lambda i: (0, i)),                 # x
            pl.BlockSpec((HIDDEN_DIM, DATA_DIM), full),                     # w1
            pl.BlockSpec((HIDDEN_DIM, 1), full),                            # b1
            pl.BlockSpec((NUM_HIDDEN_LAYER, HIDDEN_DIM, HIDDEN_DIM),
                         lambda i: (0, 0, 0)),                              # wh
            pl.BlockSpec((NUM_HIDDEN_LAYER, HIDDEN_DIM, 1),
                         lambda i: (0, 0, 0)),                              # bh
            pl.BlockSpec((HALF_DIM, HIDDEN_DIM), full),                     # w2
            pl.BlockSpec((HALF_DIM, 1), full),                              # b2
            pl.BlockSpec((HALF_DIM, NUM_CLASSES), full),                    # wo
            pl.BlockSpec((NUM_CLASSES, 1), full),                           # bo
        ],
        out_specs=pl.BlockSpec((NUM_CLASSES, tb), lambda i: (0, i)),
        compiler_params=pltpu.CompilerParams(
            dimension_semantics=("parallel",)),
    )(x_t, w1, b1, wh, bh, w2, b2, wo, bo)

    return out_t[:, :batch].T                        # (batch, NUM_CLASSES)


def init_params(key):
    """Deterministic init.  Weights are PyTorch-style (out_features, in_features)
    except wo which is stored (in_features, num_classes) so the kernel can slice
    per-class columns; biases are (out_features, 1) for lane broadcasting."""
    ks = jax.random.split(key, 8)
    w1 = jax.random.normal(ks[0], (HIDDEN_DIM, DATA_DIM), jnp.float32) * 0.1
    b1 = jax.random.normal(ks[1], (HIDDEN_DIM, 1), jnp.float32) * 0.1
    wh = jax.random.normal(ks[2], (NUM_HIDDEN_LAYER, HIDDEN_DIM, HIDDEN_DIM),
                           jnp.float32) * 0.1
    bh = jax.random.normal(ks[3], (NUM_HIDDEN_LAYER, HIDDEN_DIM, 1),
                           jnp.float32) * 0.1
    w2 = jax.random.normal(ks[4], (HALF_DIM, HIDDEN_DIM), jnp.float32) * 0.1
    b2 = jax.random.normal(ks[5], (HALF_DIM, 1), jnp.float32) * 0.1
    wo = jax.random.normal(ks[6], (HALF_DIM, NUM_CLASSES), jnp.float32) * 0.1
    bo = jax.random.normal(ks[7], (NUM_CLASSES, 1), jnp.float32) * 0.1
    return (w1, b1, wh, bh, w2, b2, wo, bo)


def reference_forward(x, params):
    """Pure-JAX reference replicating the PyTorch forward() semantics."""
    (w1, b1, wh, bh, w2, b2, wo, bo) = params
    hi = jax.lax.Precision.HIGHEST
    h = jnp.maximum(jnp.dot(x, w1.T, precision=hi) + b1[:, 0], 0.0)
    for i in range(NUM_HIDDEN_LAYER):
        h = jnp.maximum(jnp.dot(h, wh[i].T, precision=hi) + bh[i, :, 0], 0.0)
    h = jnp.maximum(jnp.dot(h, w2.T, precision=hi) + b2[:, 0], 0.0)
    return jnp.dot(h, wo, precision=hi) + bo[:, 0]


if __name__ == "__main__":
    key = jax.random.PRNGKey(0)
    kx, kp = jax.random.split(key)

    batch = 8
    x = jax.random.normal(kx, (batch, DATA_DIM), jnp.float32)
    params = init_params(kp)

    out = jax.block_until_ready(classifier_forward(x, params))
    ref = reference_forward(x, params)

    assert out.shape == (batch, NUM_CLASSES)
    assert jnp.allclose(out, ref, atol=1e-5, rtol=1e-5), "Pallas output mismatch"

    print("KERNEL_OK")
</pallas_src>

<mosaic_0001>
module attributes {stable_mosaic.version = 11 : i64} {
  func.func @classifier_kernel(%arg0: i32, %arg1: memref<2x128xf32, #tpu.memory_space<vmem>>, %arg2: memref<32x2xf32, #tpu.memory_space<vmem>>, %arg3: memref<32x1xf32, #tpu.memory_space<vmem>>, %arg4: memref<3x32x32xf32, #tpu.memory_space<vmem>>, %arg5: memref<3x32x1xf32, #tpu.memory_space<vmem>>, %arg6: memref<16x32xf32, #tpu.memory_space<vmem>>, %arg7: memref<16x1xf32, #tpu.memory_space<vmem>>, %arg8: memref<16x2xf32, #tpu.memory_space<vmem>>, %arg9: memref<2x1xf32, #tpu.memory_space<vmem>>, %arg10: memref<2x128xf32, #tpu.memory_space<vmem>>) attributes {dimension_semantics = [#tpu.dimension_semantics<parallel>], iteration_bounds = array<i64: 1>, scalar_prefetch = 0 : i64, scratch_operands = 0 : i64, tpu.core_type = #tpu.core_type<tc>, window_params = [{transform_indices = @transform_0, window_bounds = array<i64: 2, 128>}, {pipeline_mode = #tpu.pipeline_mode<synchronous>, transform_indices = @transform_1, window_bounds = array<i64: 32, 2>}, {pipeline_mode = #tpu.pipeline_mode<synchronous>, transform_indices = @transform_2, window_bounds = array<i64: 32, 1>}, {pipeline_mode = #tpu.pipeline_mode<synchronous>, transform_indices = @transform_3, window_bounds = array<i64: 3, 32, 32>}, {pipeline_mode = #tpu.pipeline_mode<synchronous>, transform_indices = @transform_4, window_bounds = array<i64: 3, 32, 1>}, {pipeline_mode = #tpu.pipeline_mode<synchronous>, transform_indices = @transform_5, window_bounds = array<i64: 16, 32>}, {pipeline_mode = #tpu.pipeline_mode<synchronous>, transform_indices = @transform_6, window_bounds = array<i64: 16, 1>}, {pipeline_mode = #tpu.pipeline_mode<synchronous>, transform_indices = @transform_7, window_bounds = array<i64: 16, 2>}, {pipeline_mode = #tpu.pipeline_mode<synchronous>, transform_indices = @transform_8, window_bounds = array<i64: 2, 1>}, {transform_indices = @transform_9, window_bounds = array<i64: 2, 128>}]} {
    %c0 = arith.constant 0 : index
    %c0_0 = arith.constant 0 : index
    %0 = vector.load %arg1[%c0, %c0_0] : memref<2x128xf32, #tpu.memory_space<vmem>>, vector<2x128xf32>
    %c0_1 = arith.constant 0 : index
    %c0_2 = arith.constant 0 : index
    %1 = vector.load %arg2[%c0_1, %c0_2] : memref<32x2xf32, #tpu.memory_space<vmem>>, vector<32x1xf32>
    %2 = vector.extract_strided_slice %0 {offsets = [0, 0], sizes = [1, 128], strides = [1, 1]} : vector<2x128xf32> to vector<1x128xf32>
    %3 = vector.broadcast %1 : vector<32x1xf32> to vector<32x128xf32>
    %4 = vector.broadcast %2 : vector<1x128xf32> to vector<32x128xf32>
    %5 = arith.mulf %3, %4 : vector<32x128xf32>
    %c0_3 = arith.constant 0 : index
    %c1 = arith.constant 1 : index
    %6 = vector.load %arg2[%c0_3, %c1] : memref<32x2xf32, #tpu.memory_space<vmem>>, vector<32x1xf32>
    %7 = vector.extract_strided_slice %0 {offsets = [1, 0], sizes = [1, 128], strides = [1, 1]} : vector<2x128xf32> to vector<1x128xf32>
    %8 = vector.broadcast %6 : vector<32x1xf32> to vector<32x128xf32>
    %9 = vector.broadcast %7 : vector<1x128xf32> to vector<32x128xf32>
    %10 = arith.mulf %8, %9 : vector<32x128xf32>
    %11 = arith.addf %5, %10 : vector<32x128xf32>
    %c0_4 = arith.constant 0 : index
    %c0_5 = arith.constant 0 : index
    %12 = vector.load %arg3[%c0_4, %c0_5] : memref<32x1xf32, #tpu.memory_space<vmem>>, vector<32x1xf32>
    %13 = vector.broadcast %12 : vector<32x1xf32> to vector<32x128xf32>
    %14 = arith.addf %11, %13 : vector<32x128xf32>
    %cst = arith.constant 0.000000e+00 : f32
    %15 = vector.broadcast %cst : f32 to vector<32x128xf32>
    %16 = arith.maximumf %14, %15 : vector<32x128xf32>
    %c0_6 = arith.constant 0 : index
    %c0_7 = arith.constant 0 : index
    %c0_8 = arith.constant 0 : index
    %17 = vector.load %arg4[%c0_6, %c0_7, %c0_8] : memref<3x32x32xf32, #tpu.memory_space<vmem>>, vector<1x32x32xf32>
    %18 = vector.shape_cast %17 : vector<1x32x32xf32> to vector<32x32xf32>
    %cst_9 = arith.constant dense<0.000000e+00> : vector<32x128xf32>
    %19 = tpu.matmul %18, %16, %cst_9 {dimension_numbers = #tpu.dot_dimension_numbers<[1], [0], [0], [1], [0, 0, 1, 1], [], []>} : vector<32x32xf32>, vector<32x128xf32>, vector<32x128xf32> -> vector<32x128xf32>
    %c0_10 = arith.constant 0 : index
    %c0_11 = arith.constant 0 : index
    %c0_12 = arith.constant 0 : index
    %20 = vector.load %arg5[%c0_10, %c0_11, %c0_12] : memref<3x32x1xf32, #tpu.memory_space<vmem>>, vector<1x32x1xf32>
    %21 = vector.shape_cast %20 : vector<1x32x1xf32> to vector<32x1xf32>
    %22 = vector.broadcast %21 : vector<32x1xf32> to vector<32x128xf32>
    %23 = arith.addf %19, %22 : vector<32x128xf32>
    %cst_13 = arith.constant 0.000000e+00 : f32
    %24 = vector.broadcast %cst_13 : f32 to vector<32x128xf32>
    %25 = arith.maximumf %23, %24 : vector<32x128xf32>
    %c1_14 = arith.constant 1 : index
    %c0_15 = arith.constant 0 : index
    %c0_16 = arith.constant 0 : index
    %26 = vector.load %arg4[%c1_14, %c0_15, %c0_16] : memref<3x32x32xf32, #tpu.memory_space<vmem>>, vector<1x32x32xf32>
    %27 = vector.shape_cast %26 : vector<1x32x32xf32> to vector<32x32xf32>
    %cst_17 = arith.constant dense<0.000000e+00> : vector<32x128xf32>
    %28 = tpu.matmul %27, %25, %cst_17 {dimension_numbers = #tpu.dot_dimension_numbers<[1], [0], [0], [1], [0, 0, 1, 1], [], []>} : vector<32x32xf32>, vector<32x128xf32>, vector<32x128xf32> -> vector<32x128xf32>
    %c1_18 = arith.constant 1 : index
    %c0_19 = arith.constant 0 : index
    %c0_20 = arith.constant 0 : index
    %29 = vector.load %arg5[%c1_18, %c0_19, %c0_20] : memref<3x32x1xf32, #tpu.memory_space<vmem>>, vector<1x32x1xf32>
    %30 = vector.shape_cast %29 : vector<1x32x1xf32> to vector<32x1xf32>
    %31 = vector.broadcast %30 : vector<32x1xf32> to vector<32x128xf32>
    %32 = arith.addf %28, %31 : vector<32x128xf32>
    %cst_21 = arith.constant 0.000000e+00 : f32
    %33 = vector.broadcast %cst_21 : f32 to vector<32x128xf32>
    %34 = arith.maximumf %32, %33 : vector<32x128xf32>
    %c2 = arith.constant 2 : index
    %c0_22 = arith.constant 0 : index
    %c0_23 = arith.constant 0 : index
    %35 = vector.load %arg4[%c2, %c0_22, %c0_23] : memref<3x32x32xf32, #tpu.memory_space<vmem>>, vector<1x32x32xf32>
    %36 = vector.shape_cast %35 : vector<1x32x32xf32> to vector<32x32xf32>
    %cst_24 = arith.constant dense<0.000000e+00> : vector<32x128xf32>
    %37 = tpu.matmul %36, %34, %cst_24 {dimension_numbers = #tpu.dot_dimension_numbers<[1], [0], [0], [1], [0, 0, 1, 1], [], []>} : vector<32x32xf32>, vector<32x128xf32>, vector<32x128xf32> -> vector<32x128xf32>
    %c2_25 = arith.constant 2 : index
    %c0_26 = arith.constant 0 : index
    %c0_27 = arith.constant 0 : index
    %38 = vector.load %arg5[%c2_25, %c0_26, %c0_27] : memref<3x32x1xf32, #tpu.memory_space<vmem>>, vector<1x32x1xf32>
    %39 = vector.shape_cast %38 : vector<1x32x1xf32> to vector<32x1xf32>
    %40 = vector.broadcast %39 : vector<32x1xf32> to vector<32x128xf32>
    %41 = arith.addf %37, %40 : vector<32x128xf32>
    %cst_28 = arith.constant 0.000000e+00 : f32
    %42 = vector.broadcast %cst_28 : f32 to vector<32x128xf32>
    %43 = arith.maximumf %41, %42 : vector<32x128xf32>
    %c0_29 = arith.constant 0 : index
    %c0_30 = arith.constant 0 : index
    %44 = vector.load %arg6[%c0_29, %c0_30] : memref<16x32xf32, #tpu.memory_space<vmem>>, vector<16x32xf32>
    %cst_31 = arith.constant dense<0.000000e+00> : vector<16x128xf32>
    %45 = tpu.matmul %44, %43, %cst_31 {dimension_numbers = #tpu.dot_dimension_numbers<[1], [0], [0], [1], [0, 0, 1, 1], [], []>} : vector<16x32xf32>, vector<32x128xf32>, vector<16x128xf32> -> vector<16x128xf32>
    %c0_32 = arith.constant 0 : index
    %c0_33 = arith.constant 0 : index
    %46 = vector.load %arg7[%c0_32, %c0_33] : memref<16x1xf32, #tpu.memory_space<vmem>>, vector<16x1xf32>
    %47 = vector.broadcast %46 : vector<16x1xf32> to vector<16x128xf32>
    %48 = arith.addf %45, %47 : vector<16x128xf32>
    %cst_34 = arith.constant 0.000000e+00 : f32
    %49 = vector.broadcast %cst_34 : f32 to vector<16x128xf32>
    %50 = arith.maximumf %48, %49 : vector<16x128xf32>
    %c0_35 = arith.constant 0 : index
    %c0_36 = arith.constant 0 : index
    %51 = vector.load %arg8[%c0_35, %c0_36] : memref<16x2xf32, #tpu.memory_space<vmem>>, vector<16x1xf32>
    %52 = vector.broadcast %51 : vector<16x1xf32> to vector<16x128xf32>
    %53 = arith.mulf %52, %50 : vector<16x128xf32>
    %cst_37 = arith.constant dense<0.000000e+00> : vector<128xf32>
    %54 = vector.multi_reduction <add>, %53, %cst_37 [0] : vector<16x128xf32> to vector<128xf32>
    %55 = vector.shape_cast %54 : vector<128xf32> to vector<1x128xf32>
    %c0_38 = arith.constant 0 : index
    %c1_39 = arith.constant 1 : index
    %56 = vector.load %arg8[%c0_38, %c1_39] : memref<16x2xf32, #tpu.memory_space<vmem>>, vector<16x1xf32>
    %57 = vector.broadcast %56 : vector<16x1xf32> to vector<16x128xf32>
    %58 = arith.mulf %57, %50 : vector<16x128xf32>
    %cst_40 = arith.constant dense<0.000000e+00> : vector<128xf32>
    %59 = vector.multi_reduction <add>, %58, %cst_40 [0] : vector<16x128xf32> to vector<128xf32>
    %60 = vector.shape_cast %59 : vector<128xf32> to vector<1x128xf32>
    %61 = tpu.concatenate %55, %60 in 0 : vector<1x128xf32>, vector<1x128xf32> -> vector<2x128xf32>
    %c0_41 = arith.constant 0 : index
    %c0_42 = arith.constant 0 : index
    %62 = vector.load %arg9[%c0_41, %c0_42] : memref<2x1xf32, #tpu.memory_space<vmem>>, vector<2x1xf32>
    %63 = vector.broadcast %62 : vector<2x1xf32> to vector<2x128xf32>
    %64 = arith.addf %61, %63 : vector<2x128xf32>
    %c0_43 = arith.constant 0 : index
    %c0_44 = arith.constant 0 : index
    %65 = vector.load %arg10[%c0_43, %c0_44] : memref<2x128xf32, #tpu.memory_space<vmem>>, vector<2x128xf32>
    tpu.vector_store %arg10[%c0_43, %c0_44], %64 {strides = array<i32>} : memref<2x128xf32, #tpu.memory_space<vmem>>, vector<2x128xf32>,
    return
  }
  func.func @transform_0(%arg0: i32) -> (i32, i32) {
    %c0_i32 = arith.constant 0 : i32
    %c0_i32_0 = arith.constant 0 : i32
    return %c0_i32, %arg0 : i32, i32
  }
  func.func @transform_1(%arg0: i32) -> (i32, i32) {
    %c0_i32 = arith.constant 0 : i32
    %c0_i32_0 = arith.constant 0 : i32
    %c0_i32_1 = arith.constant 0 : i32
    return %c0_i32, %c0_i32_0 : i32, i32
  }
  func.func @transform_2(%arg0: i32) -> (i32, i32) {
    %c0_i32 = arith.constant 0 : i32
    %c0_i32_0 = arith.constant 0 : i32
    %c0_i32_1 = arith.constant 0 : i32
    return %c0_i32, %c0_i32_0 : i32, i32
  }
  func.func @transform_3(%arg0: i32) -> (i32, i32, i32) {
    %c0_i32 = arith.constant 0 : i32
    %c0_i32_0 = arith.constant 0 : i32
    %c0_i32_1 = arith.constant 0 : i32
    %c0_i32_2 = arith.constant 0 : i32
    return %c0_i32, %c0_i32_0, %c0_i32_1 : i32, i32, i32
  }
  func.func @transform_4(%arg0: i32) -> (i32, i32, i32) {
    %c0_i32 = arith.constant 0 : i32
    %c0_i32_0 = arith.constant 0 : i32
    %c0_i32_1 = arith.constant 0 : i32
    %c0_i32_2 = arith.constant 0 : i32
    return %c0_i32, %c0_i32_0, %c0_i32_1 : i32, i32, i32
  }
  func.func @transform_5(%arg0: i32) -> (i32, i32) {
    %c0_i32 = arith.constant 0 : i32
    %c0_i32_0 = arith.constant 0 : i32
    %c0_i32_1 = arith.constant 0 : i32
    return %c0_i32, %c0_i32_0 : i32, i32
  }
  func.func @transform_6(%arg0: i32) -> (i32, i32) {
    %c0_i32 = arith.constant 0 : i32
    %c0_i32_0 = arith.constant 0 : i32
    %c0_i32_1 = arith.constant 0 : i32
    return %c0_i32, %c0_i32_0 : i32, i32
  }
  func.func @transform_7(%arg0: i32) -> (i32, i32) {
    %c0_i32 = arith.constant 0 : i32
    %c0_i32_0 = arith.constant 0 : i32
    %c0_i32_1 = arith.constant 0 : i32
    return %c0_i32, %c0_i32_0 : i32, i32
  }
  func.func @transform_8(%arg0: i32) -> (i32, i32) {
    %c0_i32 = arith.constant 0 : i32
    %c0_i32_0 = arith.constant 0 : i32
    %c0_i32_1 = arith.constant 0 : i32
    return %c0_i32, %c0_i32_0 : i32, i32
  }
  func.func @transform_9(%arg0: i32) -> (i32, i32) {
    %c0_i32 = arith.constant 0 : i32
    %c0_i32_0 = arith.constant 0 : i32
    return %c0_i32, %arg0 : i32, i32
  }
}

</mosaic_0001>

<llo_original>
// kernel: classifier_forward.1
$region0: #{classifier_forward.1}
  #allocation0 [shape = 'u32[]', space=smem, size = 0x4, offset = 0x4, fixed_abs, tag = 'smem constant byte address 0x4 - core index']
  #allocation1 [shape = 'u32[144,128]{1,0:T(1,128)}', space=vmem, size = 0x12000, scoped, tag = 'internal scratch']
  %s0 = inlined_call_operand.vmem [shape: f32[2,128], index: 0, kind: input, shape index: {}]
  %s1 = inlined_call_operand.vmem [shape: f32[32,2], index: 1, kind: input, shape index: {}]
  %s2 = inlined_call_operand.vmem [shape: f32[32,1], index: 2, kind: input, shape index: {}]
  %s3 = inlined_call_operand.vmem [shape: f32[3,32,32], index: 3, kind: input, shape index: {}]
  %s4 = inlined_call_operand.vmem [shape: f32[3,32,1], index: 4, kind: input, shape index: {}]
  %s5 = inlined_call_operand.vmem [shape: f32[16,32], index: 5, kind: input, shape index: {}]
  %s6 = inlined_call_operand.vmem [shape: f32[16,1], index: 6, kind: input, shape index: {}]
  %s7 = inlined_call_operand.vmem [shape: f32[16,2], index: 7, kind: input, shape index: {}]
  %s8 = inlined_call_operand.vmem [shape: f32[2,1], index: 8, kind: input, shape index: {}]
  %s9 = inlined_call_operand.vmem [shape: f32[2,128], index: 9, kind: output, shape index: {}]
  %s10 = sld [smem:[#allocation0]]
  $region46: #{classifier_forward.1} parent=0
    _
  %s12 = ssub.s32 1, %s10
  %s13 = scalar_select 0, %s12, %s10
  // Predicated region
  $region2: #{classifier_forward.1} parent=0 // pred_check
    _
  $region3: #{classifier_forward.1} parent=0 // pred_check_branch
    %15 = sbr.rel (0) target = $region5
  $region4: #{classifier_forward.1} parent=0 // pred_region
    _
  $region5: #{classifier_forward.1} parent=0 // pred_fallthru
    _
  // Predicated region
  $region6: #{classifier_forward.1} parent=0 // pred_check
    _
  $region7: #{classifier_forward.1} parent=0 // pred_check_branch
    %17 = sbr.rel (0) target = $region9
  $region8: #{classifier_forward.1} parent=0 // pred_region
    _
  $region9: #{classifier_forward.1} parent=0 // pred_fallthru
    _
  // Predicated region
  $region10: #{classifier_forward.1} parent=0 // pred_check
    _
  $region11: #{classifier_forward.1} parent=0 // pred_check_branch
    %19 = sbr.rel (0) target = $region13
  $region12: #{classifier_forward.1} parent=0 // pred_region
    _
  $region13: #{classifier_forward.1} parent=0 // pred_fallthru
    _
  // Predicated region
  $region14: #{classifier_forward.1} parent=0 // pred_check
    _
  $region15: #{classifier_forward.1} parent=0 // pred_check_branch
    %21 = sbr.rel (0) target = $region17
  $region16: #{classifier_forward.1} parent=0 // pred_region
    _
  $region17: #{classifier_forward.1} parent=0 // pred_fallthru
    _
  // Predicated region
  $region18: #{classifier_forward.1} parent=0 // pred_check
    _
  $region19: #{classifier_forward.1} parent=0 // pred_check_branch
    %23 = sbr.rel (0) target = $region21
  $region20: #{classifier_forward.1} parent=0 // pred_region
    _
  $region21: #{classifier_forward.1} parent=0 // pred_fallthru
    _
  // Predicated region
  $region22: #{classifier_forward.1} parent=0 // pred_check
    _
  $region23: #{classifier_forward.1} parent=0 // pred_check_branch
    %25 = sbr.rel (0) target = $region25
  $region24: #{classifier_forward.1} parent=0 // pred_region
    _
  $region25: #{classifier_forward.1} parent=0 // pred_fallthru
    _
  // Predicated region
  $region26: #{classifier_forward.1} parent=0 // pred_check
    _
  $region27: #{classifier_forward.1} parent=0 // pred_check_branch
    %27 = sbr.rel (0) target = $region29
  $region28: #{classifier_forward.1} parent=0 // pred_region
    _
  $region29: #{classifier_forward.1} parent=0 // pred_fallthru
    _
  // Predicated region
  $region30: #{classifier_forward.1} parent=0 // pred_check
    _
  $region31: #{classifier_forward.1} parent=0 // pred_check_branch
    %29 = sbr.rel (0) target = $region33
  $region32: #{classifier_forward.1} parent=0 // pred_region
    _
  $region33: #{classifier_forward.1} parent=0 // pred_fallthru
    _
  // Predicated region
  $region34: #{classifier_forward.1} parent=0 // pred_check
    _
  $region35: #{classifier_forward.1} parent=0 // pred_check_branch
    %31 = sbr.rel (0) target = $region37
  $region36: #{classifier_forward.1} parent=0 // pred_region
    _
  $region37: #{classifier_forward.1} parent=0 // pred_fallthru
    _
  %v32 = vld [vmem:[%s0] sm:$0x3]
  %v33 = vld [vmem:[%s1] sm:$0xff]
  %v34 = vld [vmem:[%s1 + $0x8] sm:$0xff]
  %v35 = vld [vmem:[%s1 + $0x10] sm:$0xff]
  %v36 = vld [vmem:[%s1 + $0x18] sm:$0xff]
  %38 = vset.pattern.permute.xlu0 0
  %39 = vperm.xlu0 %38, %v33
  %v40 = vpop.permute.xlu0 %39
  %43 = vset.pattern.permute.xlu0 0
  %44 = vperm.xlu0 %43, %v34
  %v45 = vpop.permute.xlu0 %44
  %48 = vset.pattern.permute.xlu0 0
  %49 = vperm.xlu0 %48, %v35
  %v50 = vpop.permute.xlu0 %49
  %53 = vset.pattern.permute.xlu0 0
  %54 = vperm.xlu0 %53, %v36
  %v55 = vpop.permute.xlu0 %54
  %v57 = vlaneseq
  %v58 = vshrl.u32 %v57, 7
  %v59 = vsub.s32 0, %v58
  %v60 = vrot.slane %v32, %v59
  %v61 = vmul.f32 %v40, %v60
  %v62 = vmul.f32 %v45, %v60
  %v63 = vmul.f32 %v50, %v60
  %v64 = vmul.f32 %v55, %v60
  %65 = vset.pattern.permute.xlu0 1
  %66 = vperm.xlu0 %65, %v33
  %v67 = vpop.permute.xlu0 %66
  %69 = vset.pattern.permute.xlu0 1
  %70 = vperm.xlu0 %69, %v34
  %v71 = vpop.permute.xlu0 %70
  %73 = vset.pattern.permute.xlu0 1
  %74 = vperm.xlu0 %73, %v35
  %v75 = vpop.permute.xlu0 %74
  %77 = vset.pattern.permute.xlu0 1
  %78 = vperm.xlu0 %77, %v36
  %v79 = vpop.permute.xlu0 %78
  %v81 = vlaneseq
  %v82 = vshrl.u32 %v81, 7
  %v83 = vsub.s32 1, %v82
  %v84 = vrot.slane %v32, %v83
  %v85 = vmul.f32 %v67, %v84
  %v86 = vmul.f32 %v71, %v84
  %v87 = vmul.f32 %v75, %v84
  %v88 = vmul.f32 %v79, %v84
  %v89 = vadd.f32 %v61, %v85
  %v90 = vadd.f32 %v62, %v86
  %v91 = vadd.f32 %v63, %v87
  %v92 = vadd.f32 %v64, %v88
  %v93 = vld [vmem:[%s2] sm:$0xff]
  %v94 = vld [vmem:[%s2 + $0x8] sm:$0xff]
  %v95 = vld [vmem:[%s2 + $0x10] sm:$0xff]
  %v96 = vld [vmem:[%s2 + $0x18] sm:$0xff]
  %98 = vset.pattern.permute.xlu0 0
  %99 = vperm.xlu0 %98, %v93
  %v100 = vpop.permute.xlu0 %99
  %103 = vset.pattern.permute.xlu0 0
  %104 = vperm.xlu0 %103, %v94
  %v105 = vpop.permute.xlu0 %104
  %108 = vset.pattern.permute.xlu0 0
  %109 = vperm.xlu0 %108, %v95
  %v110 = vpop.permute.xlu0 %109
  %113 = vset.pattern.permute.xlu0 0
  %114 = vperm.xlu0 %113, %v96
  %v115 = vpop.permute.xlu0 %114
  %v117 = vadd.f32 %v89, %v100
  %v118 = vadd.f32 %v90, %v105
  %v119 = vadd.f32 %v91, %v110
  %v120 = vadd.f32 %v92, %v115
  %v121 = vmax.f32 %v117, 0.0
  %v122 = vmax.f32 %v118, 0.0
  %v123 = vmax.f32 %v119, 0.0
  %v124 = vmax.f32 %v120, 0.0
  %v125 = vld [vmem:[%s3] sm:$0xff]
  %v126 = vld [vmem:[%s3 + $0x8] sm:$0xff]
  %v127 = vld [vmem:[%s3 + $0x10] sm:$0xff]
  %v128 = vld [vmem:[%s3 + $0x18] sm:$0xff]
  %v129 = vld [vmem:[%s4] sm:$0xff]
  %v130 = vld [vmem:[%s4 + $0x8] sm:$0xff]
  %v131 = vld [vmem:[%s4 + $0x10] sm:$0xff]
  %v132 = vld [vmem:[%s4 + $0x18] sm:$0xff]
  %134 = vset.pattern.permute.xlu0 0
  %135 = vperm.xlu0 %134, %v129
  %v136 = vpop.permute.xlu0 %135
  %139 = vset.pattern.permute.xlu0 0
  %140 = vperm.xlu0 %139, %v130
  %v141 = vpop.permute.xlu0 %140
  %144 = vset.pattern.permute.xlu0 0
  %145 = vperm.xlu0 %144, %v131
  %v146 = vpop.permute.xlu0 %145
  %149 = vset.pattern.permute.xlu0 0
  %150 = vperm.xlu0 %149, %v132
  %v151 = vpop.permute.xlu0 %150
  %vm153 = vcmask 261120
  %v155 = vsel %vm153, %v125, 0
  %v158 = vsel %vm153, %v126, 0
  %v161 = vsel %vm153, %v127, 0
  %v164 = vsel %vm153, %v128, 0
  %166 = vmatprep.subr.mxu0 0.0
  %167 = vmatpush1.msra.mxu0 %v121
  %168 = vmatprep.subr.mxu0 0.0
  %169 = vmatpush1.msra.mxu0 %v122
  %170 = vmatprep.subr.mxu0 0.0
  %171 = vmatpush1.msra.mxu0 %v123
  %172 = vmatprep.subr.mxu0 0.0
  %173 = vmatpush1.msra.mxu0 %v124
  %174 = vmatprep.subr.mxu0 0.0
  %175 = vmatpush1.msra.mxu0 0.0
  %176 = vmatprep.subr.mxu0 0.0
  %177 = vmatpush1.msra.mxu0 0.0
  %178 = vmatprep.subr.mxu0 0.0
  %179 = vmatpush1.msra.mxu0 0.0
  %180 = vmatprep.subr.mxu0 0.0
  %181 = vmatpush1.msra.mxu0 0.0
  %182 = vmatprep.subr.mxu0 0.0
  %183 = vmatpush1.msra.mxu0 0.0
  %184 = vmatprep.subr.mxu0 0.0
  %185 = vmatpush1.msra.mxu0 0.0
  %186 = vmatprep.subr.mxu0 0.0
  %187 = vmatpush1.msra.mxu0 0.0
  %188 = vmatprep.subr.mxu0 0.0
  %189 = vmatpush1.msra.mxu0 0.0
  %190 = vmatprep.subr.mxu0 0.0
  %191 = vmatpush1.msra.mxu0 0.0
  %192 = vmatprep.subr.mxu0 0.0
  %193 = vmatpush1.msra.mxu0 0.0
  %194 = vmatprep.subr.mxu0 0.0
  %195 = vmatpush1.msra.mxu0 0.0
  %196 = vmatprep.subr.mxu0 0.0
  %197 = vmatpush1.msra.mxu0 0.0
  %198 = vmatprep.subr.mxu0 0.0
  %199 = vmatpush1.msra.mxu0 0.0
  %200 = vmatprep.subr.mxu0 0.0
  %201 = vmatpush1.msra.mxu0 0.0
  %202 = vmatprep.subr.mxu0 0.0
  %203 = vmatpush1.msra.mxu0 0.0
  %204 = vmatprep.subr.mxu0 0.0
  %205 = vmatpush1.msra.mxu0 0.0
  %206 = vmatprep.subr.mxu0 0.0
  %207 = vmatpush1.msra.mxu0 0.0
  %208 = vmatprep.subr.mxu0 0.0
  %209 = vmatpush1.msra.mxu0 0.0
  %210 = vmatprep.subr.mxu0 0.0
  %211 = vmatpush1.msra.mxu0 0.0
  %212 = vmatprep.subr.mxu0 0.0
  %213 = vmatpush1.msra.mxu0 0.0
  %214 = vmatprep.subr.mxu0 0.0
  %215 = vmatpush1.msra.mxu0 0.0
  %216 = vmatprep.subr.mxu0 0.0
  %217 = vmatpush1.msra.mxu0 0.0
  %218 = vmatprep.subr.mxu0 0.0
  %219 = vmatpush1.msra.mxu0 0.0
  %220 = vmatprep.subr.mxu0 0.0
  %221 = vmatpush1.msra.mxu0 0.0
  %222 = vmatprep.subr.mxu0 0.0
  %223 = vmatpush1.msra.mxu0 0.0
  %224 = vmatprep.subr.mxu0 0.0
  %225 = vmatpush1.msra.mxu0 0.0
  %226 = vmatprep.subr.mxu0 0.0
  %227 = vmatpush1.msra.mxu0 0.0
  %228 = vmatprep.subr.mxu0 0.0
  %229 = vmatpush1.msra.mxu0 0.0
  %230 = vmatprep.mubr.f32.mxu0 0.0
  %231 = vmatmul.mubr.f32.gmra.mrb[0].mxu0 %v155
  %v232 = vpop.f32.mrb[0].mxu0
  %v233 = vadd.f32 %v136, %v232
  %v234 = vpop.f32.mrb[0].mxu0
  %235 = vmatprep.mubr.f32.mxu0 0.0
  %236 = vmatmul.mubr.f32.gmra.mrb[0].mxu0 %v158
  %v237 = vpop.f32.mrb[0].mxu0
  %v238 = vadd.f32 %v141, %v237
  %v239 = vpop.f32.mrb[0].mxu0
  %240 = vmatprep.mubr.f32.mxu0 0.0
  %241 = vmatmul.mubr.f32.gmra.mrb[0].mxu0 %v161
  %v242 = vpop.f32.mrb[0].mxu0
  %v243 = vadd.f32 %v146, %v242
  %v244 = vpop.f32.mrb[0].mxu0
  %245 = vmatprep.mubr.f32.mxu0 0.0
  %246 = vmatmul.mubr.f32.gmra.mrb[0].mxu0 %v164
  %v247 = vpop.f32.mrb[0].mxu0
  %v248 = vadd.f32 %v151, %v247
  %v249 = vpop.f32.mrb[0].mxu0
  %250 = vdwg.mxu0
  %v251 = vmax.f32 %v233, 0.0
  %v252 = vmax.f32 %v238, 0.0
  %v253 = vmax.f32 %v243, 0.0
  %v254 = vmax.f32 %v248, 0.0
  %s255 = scalar_lea.vmem %s3, 32
  %v256 = vld [vmem:[%s255] sm:$0xff]
  %v257 = vld [vmem:[%s255 + $0x8] sm:$0xff]
  %v258 = vld [vmem:[%s255 + $0x10] sm:$0xff]
  %v259 = vld [vmem:[%s255 + $0x18] sm:$0xff]
  %s260 = scalar_lea.vmem %s4, 32
  %v261 = vld [vmem:[%s260] sm:$0xff]
  %v262 = vld [vmem:[%s260 + $0x8] sm:$0xff]
  %v263 = vld [vmem:[%s260 + $0x10] sm:$0xff]
  %v264 = vld [vmem:[%s260 + $0x18] sm:$0xff]
  %266 = vset.pattern.permute.xlu0 0
  %267 = vperm.xlu0 %266, %v261
  %v268 = vpop.permute.xlu0 %267
  %271 = vset.pattern.permute.xlu0 0
  %272 = vperm.xlu0 %271, %v262
  %v273 = vpop.permute.xlu0 %272
  %276 = vset.pattern.permute.xlu0 0
  %277 = vperm.xlu0 %276, %v263
  %v278 = vpop.permute.xlu0 %277
  %281 = vset.pattern.permute.xlu0 0
  %282 = vperm.xlu0 %281, %v264
  %v283 = vpop.permute.xlu0 %282
  %v286 = vsel %vm153, %v256, 0
  %v289 = vsel %vm153, %v257, 0
  %v292 = vsel %vm153, %v258, 0
  %v295 = vsel %vm153, %v259, 0
  %297 = vmatprep.subr.mxu0 0.0
  %298 = vmatpush1.msra.mxu0 %v251
  %299 = vmatprep.subr.mxu0 0.0
  %300 = vmatpush1.msra.mxu0 %v252
  %301 = vmatprep.subr.mxu0 0.0
  %302 = vmatpush1.msra.mxu0 %v253
  %303 = vmatprep.subr.mxu0 0.0
  %304 = vmatpush1.msra.mxu0 %v254
  %305 = vmatprep.subr.mxu0 0.0
  %306 = vmatpush1.msra.mxu0 0.0
  %307 = vmatprep.subr.mxu0 0.0
  %308 = vmatpush1.msra.mxu0 0.0
  %309 = vmatprep.subr.mxu0 0.0
  %310 = vmatpush1.msra.mxu0 0.0
  %311 = vmatprep.subr.mxu0 0.0
  %312 = vmatpush1.msra.mxu0 0.0
  %313 = vmatprep.subr.mxu0 0.0
  %314 = vmatpush1.msra.mxu0 0.0
  %315 = vmatprep.subr.mxu0 0.0
  %316 = vmatpush1.msra.mxu0 0.0
  %317 = vmatprep.subr.mxu0 0.0
  %318 = vmatpush1.msra.mxu0 0.0
  %319 = vmatprep.subr.mxu0 0.0
  %320 = vmatpush1.msra.mxu0 0.0
  %321 = vmatprep.subr.mxu0 0.0
  %322 = vmatpush1.msra.mxu0 0.0
  %323 = vmatprep.subr.mxu0 0.0
  %324 = vmatpush1.msra.mxu0 0.0
  %325 = vmatprep.subr.mxu0 0.0
  %326 = vmatpush1.msra.mxu0 0.0
  %327 = vmatprep.subr.mxu0 0.0
  %328 = vmatpush1.msra.mxu0 0.0
  %329 = vmatprep.subr.mxu0 0.0
  %330 = vmatpush1.msra.mxu0 0.0
  %331 = vmatprep.subr.mxu0 0.0
  %332 = vmatpush1.msra.mxu0 0.0
  %333 = vmatprep.subr.mxu0 0.0
  %334 = vmatpush1.msra.mxu0 0.0
  %335 = vmatprep.subr.mxu0 0.0
  %336 = vmatpush1.msra.mxu0 0.0
  %337 = vmatprep.subr.mxu0 0.0
  %338 = vmatpush1.msra.mxu0 0.0
  %339 = vmatprep.subr.mxu0 0.0
  %340 = vmatpush1.msra.mxu0 0.0
  %341 = vmatprep.subr.mxu0 0.0
  %342 = vmatpush1.msra.mxu0 0.0
  %343 = vmatprep.subr.mxu0 0.0
  %344 = vmatpush1.msra.mxu0 0.0
  %345 = vmatprep.subr.mxu0 0.0
  %346 = vmatpush1.msra.mxu0 0.0
  %347 = vmatprep.subr.mxu0 0.0
  %348 = vmatpush1.msra.mxu0 0.0
  %349 = vmatprep.subr.mxu0 0.0
  %350 = vmatpush1.msra.mxu0 0.0
  %351 = vmatprep.subr.mxu0 0.0
  %352 = vmatpush1.msra.mxu0 0.0
  %353 = vmatprep.subr.mxu0 0.0
  %354 = vmatpush1.msra.mxu0 0.0
  %355 = vmatprep.subr.mxu0 0.0
  %356 = vmatpush1.msra.mxu0 0.0
  %357 = vmatprep.subr.mxu0 0.0
  %358 = vmatpush1.msra.mxu0 0.0
  %359 = vmatprep.subr.mxu0 0.0
  %360 = vmatpush1.msra.mxu0 0.0
  %361 = vmatprep.mubr.f32.mxu0 0.0
  %362 = vmatmul.mubr.f32.gmra.mrb[0].mxu0 %v286
  %v363 = vpop.f32.mrb[0].mxu0
  %v364 = vadd.f32 %v268, %v363
  %v365 = vpop.f32.mrb[0].mxu0
  %366 = vmatprep.mubr.f32.mxu0 0.0
  %367 = vmatmul.mubr.f32.gmra.mrb[0].mxu0 %v289
  %v368 = vpop.f32.mrb[0].mxu0
  %v369 = vadd.f32 %v273, %v368
  %v370 = vpop.f32.mrb[0].mxu0
  %371 = vmatprep.mubr.f32.mxu0 0.0
  %372 = vmatmul.mubr.f32.gmra.mrb[0].mxu0 %v292
  %v373 = vpop.f32.mrb[0].mxu0
  %v374 = vadd.f32 %v278, %v373
  %v375 = vpop.f32.mrb[0].mxu0
  %376 = vmatprep.mubr.f32.mxu0 0.0
  %377 = vmatmul.mubr.f32.gmra.mrb[0].mxu0 %v295
  %v378 = vpop.f32.mrb[0].mxu0
  %v379 = vadd.f32 %v283, %v378
  %v380 = vpop.f32.mrb[0].mxu0
  %381 = vdwg.mxu0
  %v382 = vmax.f32 %v364, 0.0
  %v383 = vmax.f32 %v369, 0.0
  %v384 = vmax.f32 %v374, 0.0
  %v385 = vmax.f32 %v379, 0.0
  %s386 = scalar_lea.vmem %s3, 64
  %v387 = vld [vmem:[%s386] sm:$0xff]
  %v388 = vld [vmem:[%s386 + $0x8] sm:$0xff]
  %v389 = vld [vmem:[%s386 + $0x10] sm:$0xff]
  %v390 = vld [vmem:[%s386 + $0x18] sm:$0xff]
  %s391 = scalar_lea.vmem %s4, 64
  %v392 = vld [vmem:[%s391] sm:$0xff]
  %v393 = vld [vmem:[%s391 + $0x8] sm:$0xff]
  %v394 = vld [vmem:[%s391 + $0x10] sm:$0xff]
  %v395 = vld [vmem:[%s391 + $0x18] sm:$0xff]
  %397 = vset.pattern.permute.xlu0 0
  %398 = vperm.xlu0 %397, %v392
  %v399 = vpop.permute.xlu0 %398
  %402 = vset.pattern.permute.xlu0 0
  %403 = vperm.xlu0 %402, %v393
  %v404 = vpop.permute.xlu0 %403
  %407 = vset.pattern.permute.xlu0 0
  %408 = vperm.xlu0 %407, %v394
  %v409 = vpop.permute.xlu0 %408
  %412 = vset.pattern.permute.xlu0 0
  %413 = vperm.xlu0 %412, %v395
  %v414 = vpop.permute.xlu0 %413
  %v417 = vsel %vm153, %v387, 0
  %v420 = vsel %vm153, %v388, 0
  %v423 = vsel %vm153, %v389, 0
  %v426 = vsel %vm153, %v390, 0
  %428 = vmatprep.subr.mxu0 0.0
  %429 = vmatpush1.msra.mxu0 %v382
  %430 = vmatprep.subr.mxu0 0.0
  %431 = vmatpush1.msra.mxu0 %v383
  %432 = vmatprep.subr.mxu0 0.0
  %433 = vmatpush1.msra.mxu0 %v384
  %434 = vmatprep.subr.mxu0 0.0
  %435 = vmatpush1.msra.mxu0 %v385
  %436 = vmatprep.subr.mxu0 0.0
  %437 = vmatpush1.msra.mxu0 0.0
  %438 = vmatprep.subr.mxu0 0.0
  %439 = vmatpush1.msra.mxu0 0.0
  %440 = vmatprep.subr.mxu0 0.0
  %441 = vmatpush1.msra.mxu0 0.0
  %442 = vmatprep.subr.mxu0 0.0
  %443 = vmatpush1.msra.mxu0 0.0
  %444 = vmatprep.subr.mxu0 0.0
  %445 = vmatpush1.msra.mxu0 0.0
  %446 = vmatprep.subr.mxu0 0.0
  %447 = vmatpush1.msra.mxu0 0.0
  %448 = vmatprep.subr.mxu0 0.0
  %449 = vmatpush1.msra.mxu0 0.0
  %450 = vmatprep.subr.mxu0 0.0
  %451 = vmatpush1.msra.mxu0 0.0
  %452 = vmatprep.subr.mxu0 0.0
  %453 = vmatpush1.msra.mxu0 0.0
  %454 = vmatprep.subr.mxu0 0.0
  %455 = vmatpush1.msra.mxu0 0.0
  %456 = vmatprep.subr.mxu0 0.0
  %457 = vmatpush1.msra.mxu0 0.0
  %458 = vmatprep.subr.mxu0 0.0
  %459 = vmatpush1.msra.mxu0 0.0
  %460 = vmatprep.subr.mxu0 0.0
  %461 = vmatpush1.msra.mxu0 0.0
  %462 = vmatprep.subr.mxu0 0.0
  %463 = vmatpush1.msra.mxu0 0.0
  %464 = vmatprep.subr.mxu0 0.0
  %465 = vmatpush1.msra.mxu0 0.0
  %466 = vmatprep.subr.mxu0 0.0
  %467 = vmatpush1.msra.mxu0 0.0
  %468 = vmatprep.subr.mxu0 0.0
  %469 = vmatpush1.msra.mxu0 0.0
  %470 = vmatprep.subr.mxu0 0.0
  %471 = vmatpush1.msra.mxu0 0.0
  %472 = vmatprep.subr.mxu0 0.0
  %473 = vmatpush1.msra.mxu0 0.0
  %474 = vmatprep.subr.mxu0 0.0
  %475 = vmatpush1.msra.mxu0 0.0
  %476 = vmatprep.subr.mxu0 0.0
  %477 = vmatpush1.msra.mxu0 0.0
  %478 = vmatprep.subr.mxu0 0.0
  %479 = vmatpush1.msra.mxu0 0.0
  %480 = vmatprep.subr.mxu0 0.0
  %481 = vmatpush1.msra.mxu0 0.0
  %482 = vmatprep.subr.mxu0 0.0
  %483 = vmatpush1.msra.mxu0 0.0
  %484 = vmatprep.subr.mxu0 0.0
  %485 = vmatpush1.msra.mxu0 0.0
  %486 = vmatprep.subr.mxu0 0.0
  %487 = vmatpush1.msra.mxu0 0.0
  %488 = vmatprep.subr.mxu0 0.0
  %489 = vmatpush1.msra.mxu0 0.0
  %490 = vmatprep.subr.mxu0 0.0
  %491 = vmatpush1.msra.mxu0 0.0
  %492 = vmatprep.mubr.f32.mxu0 0.0
  %493 = vmatmul.mubr.f32.gmra.mrb[0].mxu0 %v417
  %v494 = vpop.f32.mrb[0].mxu0
  %v495 = vadd.f32 %v399, %v494
  %v496 = vpop.f32.mrb[0].mxu0
  %497 = vmatprep.mubr.f32.mxu0 0.0
  %498 = vmatmul.mubr.f32.gmra.mrb[0].mxu0 %v420
  %v499 = vpop.f32.mrb[0].mxu0
  %v500 = vadd.f32 %v404, %v499
  %v501 = vpop.f32.mrb[0].mxu0
  %502 = vmatprep.mubr.f32.mxu0 0.0
  %503 = vmatmul.mubr.f32.gmra.mrb[0].mxu0 %v423
  %v504 = vpop.f32.mrb[0].mxu0
  %v505 = vadd.f32 %v409, %v504
  %v506 = vpop.f32.mrb[0].mxu0
  %507 = vmatprep.mubr.f32.mxu0 0.0
  %508 = vmatmul.mubr.f32.gmra.mrb[0].mxu0 %v426
  %v509 = vpop.f32.mrb[0].mxu0
  %v510 = vadd.f32 %v414, %v509
  %v511 = vpop.f32.mrb[0].mxu0
  %512 = vdwg.mxu0
  %v513 = vmax.f32 %v495, 0.0
  %v514 = vmax.f32 %v500, 0.0
  %v515 = vmax.f32 %v505, 0.0
  %v516 = vmax.f32 %v510, 0.0
  %v517 = vld [vmem:[%s5] sm:$0xff]
  %v518 = vld [vmem:[%s5 + $0x8] sm:$0xff]
  %v519 = vld [vmem:[%s6] sm:$0xff]
  %v520 = vld [vmem:[%s6 + $0x8] sm:$0xff]
  %522 = vset.pattern.permute.xlu0 0
  %523 = vperm.xlu0 %522, %v519
  %v524 = vpop.permute.xlu0 %523
  %527 = vset.pattern.permute.xlu0 0
  %528 = vperm.xlu0 %527, %v520
  %v529 = vpop.permute.xlu0 %528
  %v532 = vsel %vm153, %v517, 0
  %v535 = vsel %vm153, %v518, 0
  %537 = vmatprep.subr.mxu0 0.0
  %538 = vmatpush1.msra.mxu0 %v513
  %539 = vmatprep.subr.mxu0 0.0
  %540 = vmatpush1.msra.mxu0 %v514
  %541 = vmatprep.subr.mxu0 0.0
  %542 = vmatpush1.msra.mxu0 %v515
  %543 = vmatprep.subr.mxu0 0.0
  %544 = vmatpush1.msra.mxu0 %v516
  %545 = vmatprep.subr.mxu0 0.0
  %546 = vmatpush1.msra.mxu0 0.0
  %547 = vmatprep.subr.mxu0 0.0
  %548 = vmatpush1.msra.mxu0 0.0
  %549 = vmatprep.subr.mxu0 0.0
  %550 = vmatpush1.msra.mxu0 0.0
  %551 = vmatprep.subr.mxu0 0.0
  %552 = vmatpush1.msra.mxu0 0.0
  %553 = vmatprep.subr.mxu0 0.0
  %554 = vmatpush1.msra.mxu0 0.0
  %555 = vmatprep.subr.mxu0 0.0
  %556 = vmatpush1.msra.mxu0 0.0
  %557 = vmatprep.subr.mxu0 0.0
  %558 = vmatpush1.msra.mxu0 0.0
  %559 = vmatprep.subr.mxu0 0.0
  %560 = vmatpush1.msra.mxu0 0.0
  %561 = vmatprep.subr.mxu0 0.0
  %562 = vmatpush1.msra.mxu0 0.0
  %563 = vmatprep.subr.mxu0 0.0
  %564 = vmatpush1.msra.mxu0 0.0
  %565 = vmatprep.subr.mxu0 0.0
  %566 = vmatpush1.msra.mxu0 0.0
  %567 = vmatprep.subr.mxu0 0.0
  %568 = vmatpush1.msra.mxu0 0.0
  %569 = vmatprep.subr.mxu0 0.0
  %570 = vmatpush1.msra.mxu0 0.0
  %571 = vmatprep.subr.mxu0 0.0
  %572 = vmatpush1.msra.mxu0 0.0
  %573 = vmatprep.subr.mxu0 0.0
  %574 = vmatpush1.msra.mxu0 0.0
  %575 = vmatprep.subr.mxu0 0.0
  %576 = vmatpush1.msra.mxu0 0.0
  %577 = vmatprep.subr.mxu0 0.0
  %578 = vmatpush1.msra.mxu0 0.0
  %579 = vmatprep.subr.mxu0 0.0
  %580 = vmatpush1.msra.mxu0 0.0
  %581 = vmatprep.subr.mxu0 0.0
  %582 = vmatpush1.msra.mxu0 0.0
  %583 = vmatprep.subr.mxu0 0.0
  %584 = vmatpush1.msra.mxu0 0.0
  %585 = vmatprep.subr.mxu0 0.0
  %586 = vmatpush1.msra.mxu0 0.0
  %587 = vmatprep.subr.mxu0 0.0
  %588 = vmatpush1.msra.mxu0 0.0
  %589 = vmatprep.subr.mxu0 0.0
  %590 = vmatpush1.msra.mxu0 0.0
  %591 = vmatprep.subr.mxu0 0.0
  %592 = vmatpush1.msra.mxu0 0.0
  %593 = vmatprep.subr.mxu0 0.0
  %594 = vmatpush1.msra.mxu0 0.0
  %595 = vmatprep.subr.mxu0 0.0
  %596 = vmatpush1.msra.mxu0 0.0
  %597 = vmatprep.subr.mxu0 0.0
  %598 = vmatpush1.msra.mxu0 0.0
  %599 = vmatprep.subr.mxu0 0.0
  %600 = vmatpush1.msra.mxu0 0.0
  %601 = vmatprep.mubr.f32.mxu0 0.0
  %602 = vmatmul.mubr.f32.gmra.mrb[0].mxu0 %v532
  %v603 = vpop.f32.mrb[0].mxu0
  %v604 = vadd.f32 %v524, %v603
  %v605 = vpop.f32.mrb[0].mxu0
  %606 = vmatprep.mubr.f32.mxu0 0.0
  %607 = vmatmul.mubr.f32.gmra.mrb[0].mxu0 %v535
  %v608 = vpop.f32.mrb[0].mxu0
  %v609 = vadd.f32 %v529, %v608
  %v610 = vpop.f32.mrb[0].mxu0
  %611 = vdwg.mxu0
  %v612 = vmax.f32 %v604, 0.0
  %v613 = vmax.f32 %v609, 0.0
  %v614 = vld [vmem:[%s7] sm:$0xff]
  %v615 = vld [vmem:[%s7 + $0x8] sm:$0xff]
  %617 = vset.pattern.permute.xlu0 0
  %618 = vperm.xlu0 %617, %v614
  %v619 = vpop.permute.xlu0 %618
  %622 = vset.pattern.permute.xlu0 0
  %623 = vperm.xlu0 %622, %v615
  %v624 = vpop.permute.xlu0 %623
  %v626 = vmul.f32 %v619, %v612
  %v627 = vmul.f32 %v624, %v613
  %v628 = vadd.f32 %v626, %v627
  %v629 = vrot.slane %v628, 4
  %v630 = vadd.f32 %v628, %v629
  %v631 = vrot.slane %v630, 2
  %v632 = vadd.f32 %v630, %v631
  %v633 = vrot.slane %v632, 1
  %v634 = vadd.f32 %v632, %v633
  %635 = vset.pattern.permute.xlu0 1
  %636 = vperm.xlu0 %635, %v614
  %v637 = vpop.permute.xlu0 %636
  %639 = vset.pattern.permute.xlu0 1
  %640 = vperm.xlu0 %639, %v615
  %v641 = vpop.permute.xlu0 %640
  %v643 = vmul.f32 %v637, %v612
  %v644 = vmul.f32 %v641, %v613
  %v645 = vadd.f32 %v643, %v644
  %v646 = vrot.slane %v645, 4
  %v647 = vadd.f32 %v645, %v646
  %v648 = vrot.slane %v647, 2
  %v649 = vadd.f32 %v647, %v648
  %v650 = vrot.slane %v649, 1
  %v651 = vadd.f32 %v649, %v650
  %vm652 = vcmask 1040384
  %v653 = vsel %vm652, %v634, %v651
  %v654 = vld [vmem:[%s8] sm:$0x3]
  %656 = vset.pattern.permute.xlu0 0
  %657 = vperm.xlu0 %656, %v654
  %v658 = vpop.permute.xlu0 %657
  %v660 = vadd.f32 %v653, %v658
  %661 = vst [vmem:[%s9] sm:$0x3] %v660
  // Predicated region
  $region38: #{classifier_forward.1} parent=0 // pred_check
    _
  $region39: #{classifier_forward.1} parent=0 // pred_check_branch
    %663 = sbr.rel (0) target = $region41
  $region40: #{classifier_forward.1} parent=0 // pred_region
    _
  $region41: #{classifier_forward.1} parent=0 // pred_fallthru
    _
  // Predicated region
  $region42: #{classifier_forward.1} parent=0 // pred_check
    _
  $region43: #{classifier_forward.1} parent=0 // pred_check_branch
    %665 = sbr.rel (0) target = $region45
  $region44: #{classifier_forward.1} parent=0 // pred_region
    _
  $region45: #{classifier_forward.1} parent=0 // pred_fallthru
    _

</llo_original>
